<compile_context>
chip_gen: v5e
topology: v5e:2x2
jax: 0.10.0
libtpu: 0.0.40
codegen_flags: <defaults>
</compile_context>

<pallas_src>
import functools

import jax
import jax.numpy as jnp
from jax.experimental import pallas as pl
from jax.experimental.pallas import tpu as pltpu

_LANES = 128
_SUBLANES = 8


def _round_up(v, m):
    return ((v + m - 1) // m) * m


def _vmem_capacity_bytes():
    try:
        cap = int(getattr(pltpu.get_tpu_info(), "vmem_capacity_bytes", 0))
        if cap > 0:
            return cap
    except Exception:
        pass
    return 64 << 20  # conservative fallback (v7x per-TensorCore size)


# ---------------------------------------------------------------------------
# Stage-1 kernels: global average pool over the flattened spatial axis.
# ---------------------------------------------------------------------------


def _pool_mean_full_kernel(x_ref, o_ref, *, inv_hw):
    """Whole HW extent in one block: single reduce + scale, no carry."""
    x = x_ref[...].astype(jnp.float32)           # upcast in-kernel; DMA stays narrow
    o_ref[...] = jnp.sum(x, axis=-1, keepdims=True) * inv_hw


def _pool_mean_tiled_kernel(x_ref, o_ref, acc_ref, *, inv_hw, hw, hw_tile):
    """HW tiled on the trailing grid axis; lane-dense f32 scratch accumulator."""
    k = pl.program_id(1)

    @pl.when(k == 0)
    def _():
        acc_ref[...] = jnp.zeros_like(acc_ref)

    x = x_ref[...].astype(jnp.float32)
    if hw % hw_tile != 0:
        # Ragged last HW tile: out-of-range lanes hold garbage -> mask to zero.
        col = k * hw_tile + jax.lax.broadcasted_iota(jnp.int32, x.shape, 1)
        x = jnp.where(col < hw, x, 0.0)

    # Lane-dense VPU accumulation: fold HW_TILE lanes onto 128 lanes. The
    # lane-aligned static slices are vreg selections and the adds co-issue
    # with the vector loads -- no per-step XLU reduce, no narrow masked store.
    partial = x[:, 0:_LANES]
    for j in range(1, hw_tile // _LANES):
        partial = partial + x[:, j * _LANES:(j + 1) * _LANES]
    acc_ref[...] += partial

    @pl.when(k == pl.num_programs(1) - 1)
    def _():
        # One cross-lane reduce + exact scale by 1/(H*W), once per row tile.
        o_ref[...] = jnp.sum(acc_ref[...], axis=-1, keepdims=True) * inv_hw


# ---------------------------------------------------------------------------
# Wrappers.
# ---------------------------------------------------------------------------


def _pool_full_hw(x2d, rows, hw, itemsize, budget, vmem_phys):
    if rows <= _SUBLANES:
        row_tile = rows                                   # full dim (exempt from /8)
    else:
        max_rows = max((budget // (2 * hw * itemsize)) // _SUBLANES * _SUBLANES,
                       _SUBLANES)
        row_tile = min(_round_up(rows, _SUBLANES), max_rows, 1024)
        # v7x megacore: keep >= 2 "parallel" row tiles when there is enough work.
        while pl.cdiv(rows, row_tile) < 2 and row_tile >= 16:
            row_tile //= 2
        if rows <= row_tile:
            row_tile = rows
    grid = (pl.cdiv(rows, row_tile),)

    needed = 2 * row_tile * hw * itemsize + 2 * row_tile * 4
    vmem_limit = int(min(vmem_phys * 3 // 4, max(needed + (4 << 20), 8 << 20)))

    return pl.pallas_call(
        functools.partial(_pool_mean_full_kernel, inv_hw=float(1.0 / hw)),
        out_shape=jax.ShapeDtypeStruct((rows, 1), jnp.float32),
        grid=grid,
        in_specs=[pl.BlockSpec((row_tile, hw), lambda i: (i, 0))],
        out_specs=pl.BlockSpec((row_tile, 1), lambda i: (i, 0)),
        compiler_params=pltpu.CompilerParams(
            dimension_semantics=("parallel",),
            vmem_limit_bytes=vmem_limit,
        ),
        cost_estimate=pl.CostEstimate(
            flops=rows * hw, transcendentals=0,
            bytes_accessed=rows * hw * itemsize + rows * 4,
        ),
    )(x2d)


def _pool_tiled(x2d, rows, hw, itemsize, budget, hw_tile_cap, vmem_phys):
    # Row tile: up to 512, >= 2 "parallel" tiles when possible (v7x megacore).
    row_tile = min(_round_up(rows, _SUBLANES), 512)
    while pl.cdiv(rows, row_tile) < 2 and row_tile >= 16:
        row_tile //= 2
    if rows <= row_tile:
        row_tile = rows

    # HW tile: lane-dense multiple of 128, sized from the VMEM budget
    # (double-buffered), never exceeding the array extent.
    max_hw_tile = (budget // (2 * max(row_tile, _SUBLANES) * itemsize)) \
        // _LANES * _LANES
    hw_tile = max(min(max_hw_tile, 8192), _LANES)
    if hw_tile_cap is not None:
        hw_tile = min(hw_tile, max((hw_tile_cap // _LANES) * _LANES, _LANES))
    hw_tile = min(hw_tile, (hw // _LANES) * _LANES)

    k_steps = pl.cdiv(hw, hw_tile)
    grid = (pl.cdiv(rows, row_tile), k_steps)

    # Deeper input pipelining when the reduction grid is long and VMEM allows
    # (mainly helps v7x, where per-step DMA latency is proportionally larger).
    n_buf = 3 if (k_steps >= 4 and
                  3 * row_tile * hw_tile * itemsize + row_tile * _LANES * 4
                  <= budget) else 2
    if n_buf == 3:
        in_spec = pl.BlockSpec((row_tile, hw_tile), lambda i, k: (i, k),
                               pipeline_mode=pl.Buffered(3))
    else:
        in_spec = pl.BlockSpec((row_tile, hw_tile), lambda i, k: (i, k))

    needed = (n_buf * row_tile * hw_tile * itemsize
              + row_tile * _LANES * 4 + 2 * row_tile * 4)
    vmem_limit = int(min(vmem_phys * 3 // 4, max(needed + (4 << 20), 8 << 20)))

    return pl.pallas_call(
        functools.partial(_pool_mean_tiled_kernel, inv_hw=float(1.0 / hw),
                          hw=hw, hw_tile=hw_tile),
        out_shape=jax.ShapeDtypeStruct((rows, 1), jnp.float32),
        grid=grid,
        in_specs=[in_spec],
        out_specs=pl.BlockSpec((row_tile, 1), lambda i, k: (i, 0)),
        scratch_shapes=[pltpu.VMEM((row_tile, _LANES), jnp.float32)],
        compiler_params=pltpu.CompilerParams(
            dimension_semantics=("parallel", "arbitrary"),
            vmem_limit_bytes=vmem_limit,
        ),
        cost_estimate=pl.CostEstimate(
            flops=rows * hw, transcendentals=0,
            bytes_accessed=rows * hw * itemsize + rows * 4,
        ),
    )(x2d)


def global_average_pool(x, weight, *, hw_tile_cap=None):
    """x: (N, C_in, H, W) NCHW; weight: (C_out, C_in, 1, 1). Returns (N, C_out, 1, 1)."""
    N, C_in, H, W = x.shape
    C_out = weight.shape[0]
    hw = H * W
    rows = N * C_in
    x2d = x.reshape(rows, hw)                    # free reshape of contiguous NCHW
    itemsize = jnp.dtype(x2d.dtype).itemsize

    vmem_phys = _vmem_capacity_bytes()
    budget = min(vmem_phys // 2, 64 << 20)       # double-buffered streaming budget

    fits_full = 2 * min(rows, _SUBLANES) * hw * itemsize <= budget
    forced_tiled = hw_tile_cap is not None and hw_tile_cap < hw
    if (fits_full and not forced_tiled) or hw <= _LANES:
        pooled = _pool_full_hw(x2d, rows, hw, itemsize, budget, vmem_phys)
    else:
        pooled = _pool_tiled(x2d, rows, hw, itemsize, budget, hw_tile_cap, vmem_phys)

    pooled = pooled.reshape(N, C_in)             # exact f32 mean per (n, c)

    # Stage 2: 1x1 conv (bias=False) + ReLU on a tiny (N, C_in) tensor.
    # Per perf review this stays in plain JAX: a dedicated Pallas launch costs
    # more in fixed overhead than the few MXU passes it would save, and XLA
    # fuses reshape/matmul/ReLU into one small fusion.
    # (TrainableAffine is the identity in the reference forward.)
    w2d = weight.reshape(C_out, C_in).astype(jnp.float32)
    out = jnp.maximum(pooled @ w2d.T, 0.0).astype(x.dtype)
    return out.reshape(N, C_out, 1, 1)


if __name__ == "__main__":
    key = jax.random.PRNGKey(0)
    kx, kw, kx2, kw2 = jax.random.split(key, 4)

    fn = jax.jit(global_average_pool, static_argnames=("hw_tile_cap",))

    # --- Test 1: nominal small shape (full-HW single-block fast path) ---
    N, C_in, H, W = 2, 4, 16, 16
    C_out = 8
    x = jax.random.normal(kx, (N, C_in, H, W), dtype=jnp.float32)
    fan_in = C_in * 1 * 1
    bound = 1.0 / (fan_in ** 0.5)
    weight = jax.random.uniform(kw, (C_out, C_in, 1, 1), jnp.float32, -bound, bound)

    y = fn(x, weight)
    jax.block_until_ready(y)

    pooled_ref = jnp.mean(x, axis=(2, 3))
    y_ref = jnp.maximum(pooled_ref @ weight.reshape(C_out, C_in).T, 0.0)
    y_ref = y_ref.reshape(N, C_out, 1, 1)
    assert y.shape == (N, C_out, 1, 1)
    assert jnp.allclose(y, y_ref, atol=1e-5, rtol=1e-5)

    # --- Test 2: ragged HW + ragged rows, forced k-tiled path (lane mask,
    #     lane-dense scratch accumulator, 3-deep input buffering) ---
    N2, C2_in, H2, W2, C2_out = 2, 6, 13, 41, 5
    x2 = jax.random.normal(kx2, (N2, C2_in, H2, W2), dtype=jnp.float32)
    bound2 = 1.0 / (C2_in ** 0.5)
    w2 = jax.random.uniform(kw2, (C2_out, C2_in, 1, 1), jnp.float32, -bound2, bound2)

    y2 = fn(x2, w2, hw_tile_cap=128)
    jax.block_until_ready(y2)

    p2_ref = jnp.mean(x2, axis=(2, 3))
    y2_ref = jnp.maximum(p2_ref @ w2.reshape(C2_out, C2_in).T, 0.0)
    y2_ref = y2_ref.reshape(N2, C2_out, 1, 1)
    assert jnp.allclose(y2, y2_ref, atol=1e-5, rtol=1e-5)

    print("KERNEL_OK")
</pallas_src>

<mosaic_0001>
module attributes {stable_mosaic.version = 11 : i64} {
  func.func @_pool_mean_full_kernel(%arg0: i32, %arg1: memref<8x256xf32, #tpu.memory_space<vmem>>, %arg2: memref<8x1xf32, #tpu.memory_space<vmem>>) attributes {dimension_semantics = [#tpu.dimension_semantics<parallel>], iteration_bounds = array<i64: 1>, scalar_prefetch = 0 : i64, scratch_operands = 0 : i64, tpu.core_type = #tpu.core_type<tc>, window_params = [{transform_indices = @transform_0, window_bounds = array<i64: 8, 256>}, {transform_indices = @transform_1, window_bounds = array<i64: 8, 1>}]} {
    %c0 = arith.constant 0 : index
    %c0_0 = arith.constant 0 : index
    %0 = vector.load %arg1[%c0, %c0_0] : memref<8x256xf32, #tpu.memory_space<vmem>>, vector<8x256xf32>
    %cst = arith.constant dense<0.000000e+00> : vector<8xf32>
    %1 = vector.multi_reduction <add>, %0, %cst [1] : vector<8x256xf32> to vector<8xf32>
    %2 = vector.shape_cast %1 : vector<8xf32> to vector<8x1xf32>
    %cst_1 = arith.constant 3.906250e-03 : f32
    %3 = vector.broadcast %cst_1 : f32 to vector<8x1xf32>
    %4 = arith.mulf %2, %3 : vector<8x1xf32>
    %c0_2 = arith.constant 0 : index
    %c0_3 = arith.constant 0 : index
    %5 = vector.load %arg2[%c0_2, %c0_3] : memref<8x1xf32, #tpu.memory_space<vmem>>, vector<8x1xf32>
    tpu.vector_store %arg2[%c0_2, %c0_3], %4 {strides = array<i32>} : memref<8x1xf32, #tpu.memory_space<vmem>>, vector<8x1xf32>,
    return
  }
  func.func @transform_0(%arg0: i32) -> (i32, i32) {
    %c0_i32 = arith.constant 0 : i32
    %c0_i32_0 = arith.constant 0 : i32
    return %arg0, %c0_i32 : i32, i32
  }
  func.func @transform_1(%arg0: i32) -> (i32, i32) {
    %c0_i32 = arith.constant 0 : i32
    %c0_i32_0 = arith.constant 0 : i32
    return %arg0, %c0_i32 : i32, i32
  }
}

</mosaic_0001>

<llo_original>
// kernel: global_average_pool.1
$region0: #{global_average_pool.1}
  #allocation0 [shape = 'u32[]', space=smem, size = 0x4, offset = 0x4, fixed_abs, tag = 'smem constant byte address 0x4 - core index']
  #allocation1 [shape = 'u32[72,128]{1,0:T(1,128)}', space=vmem, size = 0x9000, scoped, tag = 'internal scratch']
  %s0 = inlined_call_operand.vmem [shape: f32[8,256], index: 0, kind: input, shape index: {}]
  %s1 = inlined_call_operand.vmem [shape: f32[8,1], index: 1, kind: output, shape index: {}]
  %s2 = sld [smem:[#allocation0]]
  $region14: #{global_average_pool.1} parent=0
    _
  %s4 = ssub.s32 1, %s2
  %s5 = scalar_select 0, %s4, %s2
  // Predicated region
  $region2: #{global_average_pool.1} parent=0 // pred_check
    _
  $region3: #{global_average_pool.1} parent=0 // pred_check_branch
    %7 = sbr.rel (0) target = $region5
  $region4: #{global_average_pool.1} parent=0 // pred_region
    _
  $region5: #{global_average_pool.1} parent=0 // pred_fallthru
    _
  %v8 = vld [vmem:[%s0] sm:$0xff]
  %v9 = vld [vmem:[%s0 + $0x8] sm:$0xff]
  %v10 = vadd.f32 %v8, %v9
  %11 = vadd.xlane.f32.xlu0 %v10
  %v12 = vpop.xlane.xlu0 %11
  %v13 = vmul.f32 %v12, 0.00390625
  %vm14 = vcmask 7168
  %15 = vst.msk [vmem:[%s1] sm:$0xff] %vm14, %v13
  // Predicated region
  $region6: #{global_average_pool.1} parent=0 // pred_check
    _
  $region7: #{global_average_pool.1} parent=0 // pred_check_branch
    %17 = sbr.rel (0) target = $region9
  $region8: #{global_average_pool.1} parent=0 // pred_region
    _
  $region9: #{global_average_pool.1} parent=0 // pred_fallthru
    _
  // Predicated region
  $region10: #{global_average_pool.1} parent=0 // pred_check
    _
  $region11: #{global_average_pool.1} parent=0 // pred_check_branch
    %19 = sbr.rel (0) target = $region13
  $region12: #{global_average_pool.1} parent=0 // pred_region
    _
  $region13: #{global_average_pool.1} parent=0 // pred_fallthru
    _

</llo_original>
